<compile_context>
chip_gen: v7x
topology: tpu7x:2x2x1
jax: 0.10.0
libtpu: 0.0.40
codegen_flags: <defaults>
</compile_context>

<pallas_src>
import jax
import jax.numpy as jnp
from jax import lax
from jax.experimental import pallas as pl
from jax.experimental.pallas import tpu as pltpu

LANE_CHUNK = 256  # batch columns processed per inner-loop iteration (multiple of 128)


def _round_up(a, b):
    return pl.cdiv(a, b) * b


def mlp_kernel(x_ref, w1_ref, b1_ref, w2_ref, b2_ref, o_ref):
    # x_ref : [CB, 2, C]   input chunks (feature-major, batch on lanes)
    # w1_ref: [16, 2]      fc1 weight, PyTorch layout [out_feat, in_feat]
    # b1_ref: [16, 1]      fc1 bias (column)
    # w2_ref: [16, 2]      fc2 weight^T, [hidden, out_feat]
    # b2_ref: [2, 1]       fc2 bias (column)
    # o_ref : [CB, 2, C]   output chunks
    cb = x_ref.shape[0]
    chunk = x_ref.shape[2]

    # Hoist all parameter lane-broadcasts above the chunk loop (JAX won't CSE
    # broadcast_in_dim, so doing this inside the loop re-broadcasts every iter).
    w1 = w1_ref[...]
    w2 = w2_ref[...]
    w1c0 = jnp.broadcast_to(w1[:, 0:1], (16, chunk))
    w1c1 = jnp.broadcast_to(w1[:, 1:2], (16, chunk))
    b1b = jnp.broadcast_to(b1_ref[...], (16, chunk))
    w2c0 = jnp.broadcast_to(w2[:, 0:1], (16, chunk))
    w2c1 = jnp.broadcast_to(w2[:, 1:2], (16, chunk))
    b2_0 = jnp.broadcast_to(b2_ref[0:1, :], (1, chunk))
    b2_1 = jnp.broadcast_to(b2_ref[1:2, :], (1, chunk))

    def body(c, carry):
        xc = x_ref[c]                       # [2, chunk] (dynamic leading index)
        x0 = xc[0:1, :]                     # [1, chunk]
        x1 = xc[1:2, :]                     # [1, chunk]

        # fc1 (K=2): broadcast multiply-adds on the VPU -> [16, chunk]
        h = w1c0 * x0 + w1c1 * x1 + b1b
        # sigmoid(x) == 0.5 * tanh(0.5 * x) + 0.5  (exact; one EUP op/element)
        h = 0.5 * jnp.tanh(0.5 * h) + 0.5

        # fc2 (K=16, N=2): elementwise mults + cross-sublane reduces (XLU)
        out0 = jnp.sum(h * w2c0, axis=0, keepdims=True) + b2_0   # [1, chunk]
        out1 = jnp.sum(h * w2c1, axis=0, keepdims=True) + b2_1   # [1, chunk]

        # Write the two output rows directly (no sublane-concat pass).
        o_ref[c, 0:1, :] = out0.astype(o_ref.dtype)
        o_ref[c, 1:2, :] = out1.astype(o_ref.dtype)
        return carry

    lax.fori_loop(0, cb, body, 0)


def mlp_forward(x, w1, b1, w2, b2, *, tb=131072):
    """x: [B, 2]; w1: [16, 2]; b1: [16]; w2: [2, 16]; b2: [2] (PyTorch Linear layouts).

    Returns [B, 2]. The only wrapper-side HBM passes are one repack in and one
    repack out (pad + reshape + transpose-of-inner-dim-2), unavoidable while the
    public API is batch-major [B, 2].
    """
    B = x.shape[0]
    dtype = x.dtype

    # Tile geometry: CB = chunks per grid step.  Aim for >= 4 grid steps so the
    # "parallel" batch axis shards across both TensorCores on v7x, cap by `tb`.
    chunks_total = pl.cdiv(B, LANE_CHUNK)
    cb_target = max(1, pl.cdiv(chunks_total, 4))
    cb_cap = max(1, tb // LANE_CHUNK)
    CB = min(cb_target, cb_cap)
    NC_tot = _round_up(chunks_total, CB)          # total chunks, padded to grid
    B_pad = NC_tot * LANE_CHUNK
    grid = NC_tot // CB

    # Repack [B,2] -> [NC_tot, 2, LANE_CHUNK] (feature-major chunks, batch on lanes).
    xp = x if B_pad == B else jnp.pad(x, ((0, B_pad - B), (0, 0)))
    x_k = xp.reshape(NC_tot, LANE_CHUNK, 2).transpose(0, 2, 1)

    # Kernel-side parameter layouts (columns broadcast against [*, chunk]).
    w1_k = w1.astype(jnp.float32)                  # [16, 2]
    b1_k = b1.astype(jnp.float32).reshape(16, 1)   # [16, 1]
    w2_k = w2.astype(jnp.float32).T                # [16, 2]
    b2_k = b2.astype(jnp.float32).reshape(2, 1)    # [2, 1]

    out_k = pl.pallas_call(
        mlp_kernel,
        out_shape=jax.ShapeDtypeStruct((NC_tot, 2, LANE_CHUNK), dtype),
        grid_spec=pltpu.PrefetchScalarGridSpec(
            num_scalar_prefetch=0,
            grid=(grid,),
            in_specs=[
                pl.BlockSpec((CB, 2, LANE_CHUNK), lambda i: (i, 0, 0)),  # x chunks (pipelined)
                pl.BlockSpec((16, 2), lambda i: (0, 0)),  # weights: constant index_map
                pl.BlockSpec((16, 1), lambda i: (0, 0)),  #   -> VMEM-resident, no re-DMA
                pl.BlockSpec((16, 2), lambda i: (0, 0)),
                pl.BlockSpec((2, 1), lambda i: (0, 0)),
            ],
            out_specs=pl.BlockSpec((CB, 2, LANE_CHUNK), lambda i: (i, 0, 0)),
        ),
        compiler_params=pltpu.CompilerParams(
            dimension_semantics=("parallel",),      # shard batch tiles across TCs (v7x)
            vmem_limit_bytes=32 * 1024 * 1024,      # covers v5e's 16 MiB default scoped VMEM
        ),
    )(x_k, w1_k, b1_k, w2_k, b2_k)

    out = out_k.transpose(0, 2, 1).reshape(B_pad, 2)
    return out[:B] if B_pad != B else out


def init_params(key):
    # torch.nn.Linear default init: U(-1/sqrt(fan_in), 1/sqrt(fan_in)), weight [out, in].
    k1, k2, k3, k4 = jax.random.split(key, 4)
    bound1 = 1.0 / jnp.sqrt(2.0)   # fc1 fan_in = 2
    bound2 = 1.0 / jnp.sqrt(16.0)  # fc2 fan_in = 16
    w1 = jax.random.uniform(k1, (16, 2), jnp.float32, -bound1, bound1)
    b1 = jax.random.uniform(k2, (16,), jnp.float32, -bound1, bound1)
    w2 = jax.random.uniform(k3, (2, 16), jnp.float32, -bound2, bound2)
    b2 = jax.random.uniform(k4, (2,), jnp.float32, -bound2, bound2)
    return w1, b1, w2, b2


if __name__ == "__main__":
    key = jax.random.PRNGKey(0)
    kx, kp = jax.random.split(key)

    batch = 8
    x = jax.random.normal(kx, (batch, 2), jnp.float32)
    w1, b1, w2, b2 = init_params(kp)

    out = mlp_forward(x, w1, b1, w2, b2)
    jax.block_until_ready(out)

    # Reference check in plain JAX (same math as the PyTorch forward).
    ref = jax.nn.sigmoid(x @ w1.T + b1) @ w2.T + b2
    assert out.shape == (batch, 2)
    assert jnp.allclose(out, ref, atol=2e-5, rtol=2e-5), float(jnp.max(jnp.abs(out - ref)))

    print("KERNEL_OK")
</pallas_src>

<mosaic_0001>
module attributes {stable_mosaic.version = 11 : i64} {
  func.func @mlp_kernel(%arg0: i32, %arg1: memref<1x2x256xf32, #tpu.memory_space<vmem>>, %arg2: memref<16x2xf32, #tpu.memory_space<vmem>>, %arg3: memref<16x1xf32, #tpu.memory_space<vmem>>, %arg4: memref<16x2xf32, #tpu.memory_space<vmem>>, %arg5: memref<2x1xf32, #tpu.memory_space<vmem>>, %arg6: memref<1x2x256xf32, #tpu.memory_space<vmem>>) attributes {dimension_semantics = [#tpu.dimension_semantics<parallel>], iteration_bounds = array<i64: 1>, scalar_prefetch = 0 : i64, scratch_operands = 0 : i64, tpu.core_type = #tpu.core_type<tc>, window_params = [{transform_indices = @transform_0, window_bounds = array<i64: 1, 2, 256>}, {pipeline_mode = #tpu.pipeline_mode<synchronous>, transform_indices = @transform_1, window_bounds = array<i64: 16, 2>}, {pipeline_mode = #tpu.pipeline_mode<synchronous>, transform_indices = @transform_2, window_bounds = array<i64: 16, 1>}, {pipeline_mode = #tpu.pipeline_mode<synchronous>, transform_indices = @transform_3, window_bounds = array<i64: 16, 2>}, {pipeline_mode = #tpu.pipeline_mode<synchronous>, transform_indices = @transform_4, window_bounds = array<i64: 2, 1>}, {transform_indices = @transform_5, window_bounds = array<i64: 1, 2, 256>}]} {
    %c0 = arith.constant 0 : index
    %c0_0 = arith.constant 0 : index
    %0 = vector.load %arg2[%c0, %c0_0] : memref<16x2xf32, #tpu.memory_space<vmem>>, vector<16x2xf32>
    %c0_1 = arith.constant 0 : index
    %c0_2 = arith.constant 0 : index
    %1 = vector.load %arg4[%c0_1, %c0_2] : memref<16x2xf32, #tpu.memory_space<vmem>>, vector<16x2xf32>
    %2 = vector.extract_strided_slice %0 {offsets = [0, 0], sizes = [16, 1], strides = [1, 1]} : vector<16x2xf32> to vector<16x1xf32>
    %3 = vector.shape_cast %2 : vector<16x1xf32> to vector<16x1xf32>
    %4 = vector.broadcast %3 : vector<16x1xf32> to vector<16x256xf32>
    %5 = vector.extract_strided_slice %0 {offsets = [0, 1], sizes = [16, 1], strides = [1, 1]} : vector<16x2xf32> to vector<16x1xf32>
    %6 = vector.shape_cast %5 : vector<16x1xf32> to vector<16x1xf32>
    %7 = vector.broadcast %6 : vector<16x1xf32> to vector<16x256xf32>
    %c0_3 = arith.constant 0 : index
    %c0_4 = arith.constant 0 : index
    %8 = vector.load %arg3[%c0_3, %c0_4] : memref<16x1xf32, #tpu.memory_space<vmem>>, vector<16x1xf32>
    %9 = vector.shape_cast %8 : vector<16x1xf32> to vector<16x1xf32>
    %10 = vector.broadcast %9 : vector<16x1xf32> to vector<16x256xf32>
    %11 = vector.extract_strided_slice %1 {offsets = [0, 0], sizes = [16, 1], strides = [1, 1]} : vector<16x2xf32> to vector<16x1xf32>
    %12 = vector.shape_cast %11 : vector<16x1xf32> to vector<16x1xf32>
    %13 = vector.broadcast %12 : vector<16x1xf32> to vector<16x256xf32>
    %14 = vector.extract_strided_slice %1 {offsets = [0, 1], sizes = [16, 1], strides = [1, 1]} : vector<16x2xf32> to vector<16x1xf32>
    %15 = vector.shape_cast %14 : vector<16x1xf32> to vector<16x1xf32>
    %16 = vector.broadcast %15 : vector<16x1xf32> to vector<16x256xf32>
    %c0_5 = arith.constant 0 : index
    %c0_6 = arith.constant 0 : index
    %17 = vector.load %arg5[%c0_5, %c0_6] : memref<2x1xf32, #tpu.memory_space<vmem>>, vector<1x1xf32>
    %18 = vector.shape_cast %17 : vector<1x1xf32> to vector<1x1xf32>
    %19 = vector.broadcast %18 : vector<1x1xf32> to vector<1x256xf32>
    %c1 = arith.constant 1 : index
    %c0_7 = arith.constant 0 : index
    %20 = vector.load %arg5[%c1, %c0_7] : memref<2x1xf32, #tpu.memory_space<vmem>>, vector<1x1xf32>
    %21 = vector.shape_cast %20 : vector<1x1xf32> to vector<1x1xf32>
    %22 = vector.broadcast %21 : vector<1x1xf32> to vector<1x256xf32>
    %c0_i32 = arith.constant 0 : i32
    %23 = arith.index_cast %c0_i32 : i32 to index
    %c0_8 = arith.constant 0 : index
    %c0_9 = arith.constant 0 : index
    %24 = vector.load %arg1[%23, %c0_8, %c0_9] : memref<1x2x256xf32, #tpu.memory_space<vmem>>, vector<1x2x256xf32>
    %25 = vector.shape_cast %24 : vector<1x2x256xf32> to vector<2x256xf32>
    %26 = vector.extract_strided_slice %25 {offsets = [0, 0], sizes = [1, 256], strides = [1, 1]} : vector<2x256xf32> to vector<1x256xf32>
    %27 = vector.extract_strided_slice %25 {offsets = [1, 0], sizes = [1, 256], strides = [1, 1]} : vector<2x256xf32> to vector<1x256xf32>
    %28 = vector.broadcast %26 : vector<1x256xf32> to vector<16x256xf32>
    %29 = arith.mulf %4, %28 : vector<16x256xf32>
    %30 = vector.broadcast %27 : vector<1x256xf32> to vector<16x256xf32>
    %31 = arith.mulf %7, %30 : vector<16x256xf32>
    %32 = arith.addf %29, %31 : vector<16x256xf32>
    %33 = arith.addf %32, %10 : vector<16x256xf32>
    %cst = arith.constant 5.000000e-01 : f32
    %34 = vector.broadcast %cst : f32 to vector<16x256xf32>
    %35 = arith.mulf %34, %33 : vector<16x256xf32>
    %36 = math.tanh %35 : vector<16x256xf32>
    %cst_10 = arith.constant 5.000000e-01 : f32
    %37 = vector.broadcast %cst_10 : f32 to vector<16x256xf32>
    %38 = arith.mulf %37, %36 : vector<16x256xf32>
    %cst_11 = arith.constant 5.000000e-01 : f32
    %39 = vector.broadcast %cst_11 : f32 to vector<16x256xf32>
    %40 = arith.addf %38, %39 : vector<16x256xf32>
    %41 = arith.mulf %40, %13 : vector<16x256xf32>
    %cst_12 = arith.constant dense<0.000000e+00> : vector<256xf32>
    %42 = vector.multi_reduction <add>, %41, %cst_12 [0] : vector<16x256xf32> to vector<256xf32>
    %43 = vector.shape_cast %42 : vector<256xf32> to vector<1x256xf32>
    %44 = arith.addf %43, %19 : vector<1x256xf32>
    %45 = arith.mulf %40, %16 : vector<16x256xf32>
    %cst_13 = arith.constant dense<0.000000e+00> : vector<256xf32>
    %46 = vector.multi_reduction <add>, %45, %cst_13 [0] : vector<16x256xf32> to vector<256xf32>
    %47 = vector.shape_cast %46 : vector<256xf32> to vector<1x256xf32>
    %48 = arith.addf %47, %22 : vector<1x256xf32>
    %49 = arith.index_cast %c0_i32 : i32 to index
    %c0_14 = arith.constant 0 : index
    %c0_15 = arith.constant 0 : index
    %50 = vector.load %arg6[%49, %c0_14, %c0_15] : memref<1x2x256xf32, #tpu.memory_space<vmem>>, vector<1x1x256xf32>
    %51 = vector.shape_cast %50 : vector<1x1x256xf32> to vector<1x256xf32>
    %52 = vector.shape_cast %44 : vector<1x256xf32> to vector<1x1x256xf32>
    tpu.vector_store %arg6[%49, %c0_14, %c0_15], %52 {strides = array<i32>} : memref<1x2x256xf32, #tpu.memory_space<vmem>>, vector<1x1x256xf32>,
    %53 = arith.index_cast %c0_i32 : i32 to index
    %c1_16 = arith.constant 1 : index
    %c0_17 = arith.constant 0 : index
    %54 = vector.load %arg6[%53, %c1_16, %c0_17] : memref<1x2x256xf32, #tpu.memory_space<vmem>>, vector<1x1x256xf32>
    %55 = vector.shape_cast %54 : vector<1x1x256xf32> to vector<1x256xf32>
    %56 = vector.shape_cast %48 : vector<1x256xf32> to vector<1x1x256xf32>
    tpu.vector_store %arg6[%53, %c1_16, %c0_17], %56 {strides = array<i32>} : memref<1x2x256xf32, #tpu.memory_space<vmem>>, vector<1x1x256xf32>,
    %c1_i32 = arith.constant 1 : i32
    return
  }
  func.func @transform_0(%arg0: i32) -> (i32, i32, i32) {
    %c0_i32 = arith.constant 0 : i32
    %c0_i32_0 = arith.constant 0 : i32
    %c0_i32_1 = arith.constant 0 : i32
    return %arg0, %c0_i32, %c0_i32_0 : i32, i32, i32
  }
  func.func @transform_1(%arg0: i32) -> (i32, i32) {
    %c0_i32 = arith.constant 0 : i32
    %c0_i32_0 = arith.constant 0 : i32
    %c0_i32_1 = arith.constant 0 : i32
    return %c0_i32, %c0_i32_0 : i32, i32
  }
  func.func @transform_2(%arg0: i32) -> (i32, i32) {
    %c0_i32 = arith.constant 0 : i32
    %c0_i32_0 = arith.constant 0 : i32
    %c0_i32_1 = arith.constant 0 : i32
    return %c0_i32, %c0_i32_0 : i32, i32
  }
  func.func @transform_3(%arg0: i32) -> (i32, i32) {
    %c0_i32 = arith.constant 0 : i32
    %c0_i32_0 = arith.constant 0 : i32
    %c0_i32_1 = arith.constant 0 : i32
    return %c0_i32, %c0_i32_0 : i32, i32
  }
  func.func @transform_4(%arg0: i32) -> (i32, i32) {
    %c0_i32 = arith.constant 0 : i32
    %c0_i32_0 = arith.constant 0 : i32
    %c0_i32_1 = arith.constant 0 : i32
    return %c0_i32, %c0_i32_0 : i32, i32
  }
  func.func @transform_5(%arg0: i32) -> (i32, i32, i32) {
    %c0_i32 = arith.constant 0 : i32
    %c0_i32_0 = arith.constant 0 : i32
    %c0_i32_1 = arith.constant 0 : i32
    return %arg0, %c0_i32, %c0_i32_0 : i32, i32, i32
  }
}

</mosaic_0001>

<llo_original>
// kernel: tpu_custom_call.1
$region0: #{tpu_custom_call.1}
  #allocation0 [shape = 'u32[]', space=smem, size = 0x4, offset = 0x4, fixed_abs, tag = 'smem constant byte address 0x4 - core index']
  #allocation1 [shape = 'u32[144,128]{1,0:T(1,128)}', space=vmem, size = 0x12000, scoped, tag = 'internal scratch']
  %s0 = inlined_call_operand.vmem [shape: f32[1,2,256], index: 0, kind: input, shape index: {}]
  %s1 = inlined_call_operand.vmem [shape: f32[16,2], index: 1, kind: input, shape index: {}]
  %s2 = inlined_call_operand.vmem [shape: f32[16,1], index: 2, kind: input, shape index: {}]
  %s3 = inlined_call_operand.vmem [shape: f32[16,2], index: 3, kind: input, shape index: {}]
  %s4 = inlined_call_operand.vmem [shape: f32[2,1], index: 4, kind: input, shape index: {}]
  %s5 = inlined_call_operand.hbm [shape: f32[1,2,256], index: 5, kind: output, shape index: {}]
  %s6 = sld [smem:[#allocation0]]
  $region30: #{tpu_custom_call.1} parent=0
    _
  %s8 = ssub.s32 1, %s6
  %s9 = scalar_select 0, %s8, %s6
  $region1: #{tpu_custom_call.1} parent=0
    #allocation2 [shape = 'u8[2048]{0}', space=vmem, size = 0x800, scoped, tag = 'output window, operand 0, single buffered']
    #allocation3 [shape = 's32[1]{0}', space=sflag, size = 0x4, scoped, tag = 'scoped memory for tpu_custom_call.1']
    %10 = vsyncpa [#allocation3], 0
    // Predicated region
    $region2: #{tpu_custom_call.1} parent=1 // pred_check
      _
    $region3: #{tpu_custom_call.1} parent=1 // pred_check_branch
      %12 = sbr.rel (0) target = $region5
    $region4: #{tpu_custom_call.1} parent=1 // pred_region
      _
    $region5: #{tpu_custom_call.1} parent=1 // pred_fallthru
      _
    // Predicated region
    $region6: #{tpu_custom_call.1} parent=1 // pred_check
      _
    $region7: #{tpu_custom_call.1} parent=1 // pred_check_branch
      %14 = sbr.rel (0) target = $region9
    $region8: #{tpu_custom_call.1} parent=1 // pred_region
      _
    $region9: #{tpu_custom_call.1} parent=1 // pred_fallthru
      _
    // Predicated region
    $region10: #{tpu_custom_call.1} parent=1 // pred_check
      _
    $region11: #{tpu_custom_call.1} parent=1 // pred_check_branch
      %16 = sbr.rel (0) target = $region13
    $region12: #{tpu_custom_call.1} parent=1 // pred_region
      _
    $region13: #{tpu_custom_call.1} parent=1 // pred_fallthru
      _
    // Predicated region
    $region14: #{tpu_custom_call.1} parent=1 // pred_check
      _
    $region15: #{tpu_custom_call.1} parent=1 // pred_check_branch
      %18 = sbr.rel (0) target = $region17
    $region16: #{tpu_custom_call.1} parent=1 // pred_region
      _
    $region17: #{tpu_custom_call.1} parent=1 // pred_fallthru
      _
    // Predicated region
    $region18: #{tpu_custom_call.1} parent=1 // pred_check
      _
    $region19: #{tpu_custom_call.1} parent=1 // pred_check_branch
      %20 = sbr.rel (0) target = $region21
    $region20: #{tpu_custom_call.1} parent=1 // pred_region
      _
    $region21: #{tpu_custom_call.1} parent=1 // pred_fallthru
      _
    %v21 = vld [vmem:[%s1] sm:$0xff]
    %v22 = vld [vmem:[%s1 + $0x8] sm:$0xff]
    %v23 = vld [vmem:[%s3] sm:$0xff]
    %v24 = vld [vmem:[%s3 + $0x8] sm:$0xff]
    %26 = vset.pattern.permute.xlu0 0
    %27 = vperm.xlu0 %26, %v21
    %v28 = vpop.permute.xlu0 %27
    %31 = vset.pattern.permute.xlu0 0
    %32 = vperm.xlu0 %31, %v22
    %v33 = vpop.permute.xlu0 %32
    %35 = vset.pattern.permute.xlu0 1
    %36 = vperm.xlu0 %35, %v21
    %v37 = vpop.permute.xlu0 %36
    %39 = vset.pattern.permute.xlu0 1
    %40 = vperm.xlu0 %39, %v22
    %v41 = vpop.permute.xlu0 %40
    %v43 = vld [vmem:[%s2] sm:$0xff]
    %v44 = vld [vmem:[%s2 + $0x8] sm:$0xff]
    %46 = vset.pattern.permute.xlu0 0
    %47 = vperm.xlu0 %46, %v43
    %v48 = vpop.permute.xlu0 %47
    %51 = vset.pattern.permute.xlu0 0
    %52 = vperm.xlu0 %51, %v44
    %v53 = vpop.permute.xlu0 %52
    %56 = vset.pattern.permute.xlu0 0
    %57 = vperm.xlu0 %56, %v23
    %v58 = vpop.permute.xlu0 %57
    %61 = vset.pattern.permute.xlu0 0
    %62 = vperm.xlu0 %61, %v24
    %v63 = vpop.permute.xlu0 %62
    %65 = vset.pattern.permute.xlu0 1
    %66 = vperm.xlu0 %65, %v23
    %v67 = vpop.permute.xlu0 %66
    %69 = vset.pattern.permute.xlu0 1
    %70 = vperm.xlu0 %69, %v24
    %v71 = vpop.permute.xlu0 %70
    %v73 = vld [vmem:[%s4] sm:$0x1]
    %75 = vset.pattern.permute.xlu0 0
    %76 = vperm.xlu0 %75, %v73
    %v77 = vpop.permute.xlu0 %76
    %v79 = vld [vmem:[%s4 + $0x1] sm:$0x1]
    %81 = vset.pattern.permute.xlu0 0
    %82 = vperm.xlu0 %81, %v79
    %v83 = vpop.permute.xlu0 %82
    %v85 = vld [vmem:[%s0] sm:$0xf]
    %v87 = vlaneseq
    %v88 = vshrl.u32 %v87, 7
    %v89 = vsub.s32 0, %v88
    %v90 = vrot.slane %v85, %v89
    %v91 = vlaneseq
    %v92 = vshrl.u32 %v91, 7
    %v93 = vsub.s32 2, %v92
    %v94 = vrot.slane %v85, %v93
    %v97 = vlaneseq
    %v98 = vshrl.u32 %v97, 7
    %v99 = vsub.s32 0, %v98
    %v100 = vrot.slane %v90, %v99
    %v101 = vlaneseq
    %v102 = vshrl.u32 %v101, 7
    %v103 = vsub.s32 0, %v102
    %v104 = vrot.slane %v94, %v103
    %v105 = vmul.f32 %v28, %v100
    %v106 = vmul.f32 %v28, %v104
    %v107 = vmul.f32 %v33, %v100
    %v108 = vmul.f32 %v33, %v104
    %v109 = vlaneseq
    %v110 = vshrl.u32 %v109, 7
    %v111 = vsub.s32 1, %v110
    %v112 = vrot.slane %v85, %v111
    %v113 = vlaneseq
    %v114 = vshrl.u32 %v113, 7
    %v115 = vsub.s32 3, %v114
    %v116 = vrot.slane %v85, %v115
    %v119 = vlaneseq
    %v120 = vshrl.u32 %v119, 7
    %v121 = vsub.s32 1, %v120
    %v122 = vrot.slane %v112, %v121
    %v123 = vlaneseq
    %v124 = vshrl.u32 %v123, 7
    %v125 = vsub.s32 1, %v124
    %v126 = vrot.slane %v116, %v125
    %v127 = vmul.f32 %v37, %v122
    %v128 = vmul.f32 %v37, %v126
    %v129 = vmul.f32 %v41, %v122
    %v130 = vmul.f32 %v41, %v126
    %v131 = vadd.f32 %v105, %v127
    %v132 = vadd.f32 %v106, %v128
    %v133 = vadd.f32 %v107, %v129
    %v134 = vadd.f32 %v108, %v130
    %v135 = vadd.f32 %v131, %v48
    %v136 = vadd.f32 %v132, %v48
    %v137 = vadd.f32 %v133, %v53
    %v138 = vadd.f32 %v134, %v53
    %v139 = vmul.f32 %v135, 0.5
    %v140 = vmul.f32 %v136, 0.5
    %v141 = vmul.f32 %v137, 0.5
    %v142 = vmul.f32 %v138, 0.5
    %v143 = vtanh.pop %v139
    %v144 = vtanh.pop %v140
    %v145 = vtanh.pop %v141
    %v146 = vtanh.pop %v142
    %v147 = vmul.f32 %v143, 0.5
    %v148 = vmul.f32 %v144, 0.5
    %v149 = vmul.f32 %v145, 0.5
    %v150 = vmul.f32 %v146, 0.5
    %v151 = vadd.f32 %v147, 0.5
    %v152 = vadd.f32 %v148, 0.5
    %v153 = vadd.f32 %v149, 0.5
    %v154 = vadd.f32 %v150, 0.5
    %v155 = vmul.f32 %v151, %v58
    %v156 = vmul.f32 %v152, %v58
    %v157 = vmul.f32 %v153, %v63
    %v158 = vmul.f32 %v154, %v63
    %v159 = vadd.f32 %v155, %v157
    %v160 = vrot.slane %v159, 4
    %v161 = vadd.f32 %v159, %v160
    %v162 = vrot.slane %v161, 2
    %v163 = vadd.f32 %v161, %v162
    %v164 = vrot.slane %v163, 1
    %v165 = vadd.f32 %v163, %v164
    %v166 = vadd.f32 %v156, %v158
    %v167 = vrot.slane %v166, 4
    %v168 = vadd.f32 %v166, %v167
    %v169 = vrot.slane %v168, 2
    %v170 = vadd.f32 %v168, %v169
    %v171 = vrot.slane %v170, 1
    %v172 = vadd.f32 %v170, %v171
    %v173 = vadd.f32 %v165, %v77
    %v174 = vadd.f32 %v172, %v77
    %v175 = vmul.f32 %v151, %v67
    %v176 = vmul.f32 %v152, %v67
    %v177 = vmul.f32 %v153, %v71
    %v178 = vmul.f32 %v154, %v71
    %v179 = vadd.f32 %v175, %v177
    %v180 = vrot.slane %v179, 4
    %v181 = vadd.f32 %v179, %v180
    %v182 = vrot.slane %v181, 2
    %v183 = vadd.f32 %v181, %v182
    %v184 = vrot.slane %v183, 1
    %v185 = vadd.f32 %v183, %v184
    %v186 = vadd.f32 %v176, %v178
    %v187 = vrot.slane %v186, 4
    %v188 = vadd.f32 %v186, %v187
    %v189 = vrot.slane %v188, 2
    %v190 = vadd.f32 %v188, %v189
    %v191 = vrot.slane %v190, 1
    %v192 = vadd.f32 %v190, %v191
    %v193 = vadd.f32 %v185, %v83
    %v194 = vadd.f32 %v192, %v83
    %v197 = vcombine.low %v173, %v174
    %v199 = vunpack.c.l.s4 1966171168
    %v200 = vunpack.c.0.s8 %v199
    %v201 = vlaneseq
    %v202 = vshrl.u32 %v201, 7
    %v203 = vsub.s32 %v200, %v202
    %v204 = vrot.slane %v197, %v203
    %v206 = vunpack.c.l.s4 1966171168
    %v207 = vunpack.c.0.s8 %v206
    %v208 = vlaneseq
    %v209 = vshrl.u32 %v208, 7
    %v210 = vsub.s32 %v207, %v209
    %v211 = vrot.slane %v204, %v210
    %v213 = vlaneseq
    %vm214 = vcmp.ge.s32.totalorder %v213, 0
    %vm215 = vcmp.lt.s32.totalorder %v213, 256
    %vm216 = vmand %vm214, %vm215
    %217 = vst.msk [vmem:[#allocation2] ss:$2 sm:$0x3] %vm216, %v211
    %v220 = vcombine.low %v193, %v194
    %v222 = vunpack.c.l.s4 1966171168
    %v223 = vunpack.c.0.s8 %v222
    %v224 = vlaneseq
    %v225 = vshrl.u32 %v224, 7
    %v226 = vsub.s32 %v223, %v225
    %v227 = vrot.slane %v220, %v226
    %v229 = vunpack.c.l.s4 1966171168
    %v230 = vunpack.c.0.s8 %v229
    %v231 = vlaneseq
    %v232 = vshrl.u32 %v231, 7
    %v233 = vsub.s32 %v230, %v232
    %v234 = vrot.slane %v227, %v233
    %s236 = scalar_lea.vmem [#allocation2], 1
    %237 = vst.msk [vmem:[%s236] ss:$2 sm:$0x3] %vm216, %v234
    // Predicated region
    $region22: #{tpu_custom_call.1} parent=1 // pred_check
      _
    $region23: #{tpu_custom_call.1} parent=1 // pred_check_branch
      %239 = sbr.rel (0) target = $region25
    $region24: #{tpu_custom_call.1} parent=1 // pred_region
      %s241 = ssub.s32 64, 64
      %242 = vsyncadd [#allocation3], %s241
      %s244 = sshll.u32 [#allocation2], 4
      %s245 = int_to_ptr.vmem [resolvable:$true] %s244
      %247 = dma.vmem_to_hbm [thread:$0]  %s245, 64, %s5, [#allocation3]
    $region25: #{tpu_custom_call.1} parent=1 // pred_fallthru
      _
    // Predicated region
    $region26: #{tpu_custom_call.1} parent=1 // pred_check
      _
    $region27: #{tpu_custom_call.1} parent=1 // pred_check_branch
      %249 = sbr.rel (0) target = $region29
    $region28: #{tpu_custom_call.1} parent=1 // pred_region
      %250 = dma.done [#allocation3], 64
    $region29: #{tpu_custom_call.1} parent=1 // pred_fallthru
      _
    %251 = vsyncpa [#allocation3], 1

</llo_original>
